<compile_context>
chip_gen: v7x
topology: tpu7x:2x2x1
jax: 0.10.0
libtpu: 0.0.40
codegen_flags: <defaults>
</compile_context>

<pallas_src>
import functools
import math

import jax
import jax.numpy as jnp
from jax.experimental import pallas as pl
from jax.experimental.pallas import tpu as pltpu

_INV_SQRT2 = 0.7071067811865476


def _round_up(a: int, b: int) -> int:
    return ((a + b - 1) // b) * b


def _min_rows_for_dtype(dtype) -> int:
    # Sub-32-bit dtypes pack 2/4 rows per sublane; keep row tiles aligned to that.
    itemsize = jnp.dtype(dtype).itemsize
    return {1: 32, 2: 16}.get(itemsize, 8)


def _vmem_budget_bytes() -> int:
    try:
        cap = int(pltpu.get_tpu_info().vmem_capacity_bytes)
    except Exception:
        cap = 64 << 20  # conservative (v7x-sized) fallback
    # Leave headroom for compiler-internal scratch / semaphores / double buffers.
    return max(cap - (12 << 20), 32 << 20)


def _gelu_layernorm(h, gamma, beta, eps):
    # erf-GELU, exactly matching the PyTorch reference (multiply by 1/sqrt(2), no divide).
    h = h * 0.5 * (1.0 + jax.lax.erf(h * _INV_SQRT2))
    # LayerNorm over the hidden (lane) axis; two-pass moments in f32 for robustness.
    inv_h = 1.0 / h.shape[-1]
    mean = jnp.sum(h, axis=-1, keepdims=True) * inv_h
    centered = h - mean
    var = jnp.sum(centered * centered, axis=-1, keepdims=True) * inv_h
    return centered * jax.lax.rsqrt(var + eps) * gamma + beta


def _resident_kernel(x_ref, w_ref, b_ref, g_ref, beta_ref, o_ref, *, eps):
    # MXU matmul in the operands' native dtype, f32 accumulation.
    h = jnp.dot(x_ref[...], w_ref[...], preferred_element_type=jnp.float32)
    h = h + b_ref[...].astype(jnp.float32)
    h = _gelu_layernorm(h, g_ref[...].astype(jnp.float32), beta_ref[...].astype(jnp.float32), eps)
    o_ref[...] = h.astype(o_ref.dtype)


def _ktiled_kernel(x_ref, w_ref, b_ref, g_ref, beta_ref, o_ref, acc_ref, *, eps):
    k = pl.program_id(1)

    @pl.when(k == 0)
    def _():
        acc_ref[...] = jnp.zeros_like(acc_ref)

    acc_ref[...] += jnp.dot(x_ref[...], w_ref[...], preferred_element_type=jnp.float32)

    @pl.when(k == pl.num_programs(1) - 1)
    def _():
        h = acc_ref[...] + b_ref[...].astype(jnp.float32)
        h = _gelu_layernorm(h, g_ref[...].astype(jnp.float32),
                            beta_ref[...].astype(jnp.float32), eps)
        o_ref[...] = h.astype(o_ref.dtype)


def bert_prediction_head_transform(x, w, b, gamma, beta, *, eps=1e-12, tile_m=512,
                                   tile_k=None, vmem_limit_bytes=None, force_k_tiled=False):
    """Fused dense -> erf-GELU -> LayerNorm.

    x: [..., H] activations (leading dims flattened into rows).
    w: [H, H] such that y = x @ w + b (i.e. transpose of torch nn.Linear.weight).
    b, gamma, beta: [H].
    """
    orig_shape = x.shape
    H = orig_shape[-1]
    x2 = x.reshape(-1, H)
    N = x2.shape[0]
    out_dtype = x.dtype

    min_rows = _min_rows_for_dtype(x.dtype)
    x_isz = jnp.dtype(x.dtype).itemsize
    o_isz = jnp.dtype(out_dtype).itemsize
    w_isz = jnp.dtype(w.dtype).itemsize
    w_bytes = H * H * w_isz

    budget = _vmem_budget_bytes()

    b2 = b.reshape(1, H)
    g2 = gamma.reshape(1, H)
    be2 = beta.reshape(1, H)

    def resident_footprint(tm):
        return (w_bytes                     # single-buffered resident weight
                + 2 * tm * H * x_isz        # double-buffered activation tiles
                + 2 * tm * H * o_isz        # double-buffered output tiles
                + 2 * tm * H * 4            # f32 intermediates headroom
                + 3 * H * 4                 # bias / gamma / beta
                + (2 << 20))                # slack

    # K-tile size for the large-H path: must divide H and keep lanes aligned.
    tk = 0
    if tile_k is not None and H % tile_k == 0 and (tile_k % 128 == 0 or tile_k == H):
        tk = tile_k
    else:
        for cand in (512, 256, 128):
            if H % cand == 0:
                tk = cand
                break

    def ktiled_footprint(tm):
        return (2 * tk * H * w_isz          # double-buffered weight slab
                + 2 * tm * tk * x_isz       # double-buffered activation tiles
                + 2 * tm * H * o_isz        # double-buffered output tiles
                + 2 * tm * H * 4            # f32 accumulator + epilogue temps
                + 3 * H * 4
                + (2 << 20))

    use_ktiled = force_k_tiled and tk > 0
    if not use_ktiled and resident_footprint(min_rows) > budget:
        if tk > 0:
            use_ktiled = True
        # TODO(synk): add masked K-tiling for huge hidden sizes that are not a multiple of 128.

    footprint = ktiled_footprint if use_ktiled else resident_footprint

    # Row tile: as large as the VMEM budget allows (amortizes ~0.35 us/step pipeline
    # overhead), but keep >= 2 grid steps so both v7x TensorCores get work.
    if N <= min_rows:
        tm = N  # block equals the full array dim -> always a legal block shape
    else:
        tm = max(min_rows, (min(tile_m, _round_up(N, min_rows)) // min_rows) * min_rows)
        while tm > min_rows and footprint(tm) > budget:
            tm = max(min_rows, _round_up(tm // 2, min_rows))
        while tm > min_rows and pl.cdiv(N, tm) < 2:
            tm = max(min_rows, _round_up(tm // 2, min_rows))

    if vmem_limit_bytes is None:
        vmem_limit_bytes = int(max(min(footprint(tm) + (8 << 20), budget), 32 << 20))

    grid_rows = pl.cdiv(N, tm)  # cdiv grid: partial last block is masked, no jnp.pad round trip

    cost = pl.CostEstimate(
        flops=2 * N * H * H + 10 * N * H,
        transcendentals=N * H,
        bytes_accessed=N * H * (x_isz + o_isz) + w_bytes + 3 * H * 4,
    )

    def _run(single_buffer_consts):
        # Constant-index operands never change block -> one VMEM buffer is enough.
        const_kw = {"pipeline_mode": pl.Buffered(1)} if single_buffer_consts else {}

        if use_ktiled:
            kernel = functools.partial(_ktiled_kernel, eps=eps)
            grid_spec = pltpu.PrefetchScalarGridSpec(
                num_scalar_prefetch=0,
                grid=(grid_rows, H // tk),
                in_specs=[
                    pl.BlockSpec((tm, tk), lambda i, k: (i, k)),            # activation tile
                    pl.BlockSpec((tk, H), lambda i, k: (k, 0)),             # weight slab (dbl-buf)
                    pl.BlockSpec((1, H), lambda i, k: (0, 0), **const_kw),  # bias
                    pl.BlockSpec((1, H), lambda i, k: (0, 0), **const_kw),  # LN gamma
                    pl.BlockSpec((1, H), lambda i, k: (0, 0), **const_kw),  # LN beta
                ],
                out_specs=pl.BlockSpec((tm, H), lambda i, k: (i, 0)),
                scratch_shapes=[pltpu.VMEM((tm, H), jnp.float32)],
            )
            dims = ("parallel", "arbitrary")
        else:
            kernel = functools.partial(_resident_kernel, eps=eps)
            grid_spec = pltpu.PrefetchScalarGridSpec(
                num_scalar_prefetch=0,
                grid=(grid_rows,),
                in_specs=[
                    pl.BlockSpec((tm, H), lambda i: (i, 0)),                # activation tile
                    pl.BlockSpec((H, H), lambda i: (0, 0), **const_kw),     # resident weight
                    pl.BlockSpec((1, H), lambda i: (0, 0), **const_kw),     # bias
                    pl.BlockSpec((1, H), lambda i: (0, 0), **const_kw),     # LN gamma
                    pl.BlockSpec((1, H), lambda i: (0, 0), **const_kw),     # LN beta
                ],
                out_specs=pl.BlockSpec((tm, H), lambda i: (i, 0)),
            )
            dims = ("parallel",)

        return pl.pallas_call(
            kernel,
            out_shape=jax.ShapeDtypeStruct((N, H), out_dtype),
            grid_spec=grid_spec,
            compiler_params=pltpu.CompilerParams(
                dimension_semantics=dims,
                vmem_limit_bytes=vmem_limit_bytes,
            ),
            cost_estimate=cost,
        )(x2, w, b2, g2, be2)

    try:
        out = _run(True)
    except Exception:
        # Fallback for jax builds where pipeline_mode=pl.Buffered(1) is not accepted.
        out = _run(False)

    return out.reshape(orig_shape)


def reference(x, w, b, gamma, beta, eps=1e-12):
    h = jnp.dot(x.astype(jnp.float32), w.astype(jnp.float32),
                precision=jax.lax.Precision.HIGHEST) + b
    h = h * 0.5 * (1.0 + jax.lax.erf(h / math.sqrt(2.0)))
    mean = jnp.mean(h, axis=-1, keepdims=True)
    var = jnp.mean(jnp.square(h - mean), axis=-1, keepdims=True)
    return ((h - mean) / jnp.sqrt(var + eps)) * gamma + beta


if __name__ == "__main__":
    batch, seq, hidden = 2, 8, 32
    eps = 1e-12

    key = jax.random.PRNGKey(0)
    k_x, k_w, k_b, k_g, k_bt = jax.random.split(key, 5)

    x = jax.random.normal(k_x, (batch, seq, hidden), dtype=jnp.float32)
    # nn.Linear(hidden, hidden): weight (out, in); pass its transpose so y = x @ w + b
    w_t = jax.random.normal(k_w, (hidden, hidden), dtype=jnp.float32) * 0.02
    b = jax.random.normal(k_b, (hidden,), dtype=jnp.float32) * 0.02
    gamma = jnp.ones((hidden,), dtype=jnp.float32) + 0.01 * jax.random.normal(k_g, (hidden,))
    beta = 0.01 * jax.random.normal(k_bt, (hidden,), dtype=jnp.float32)

    # Main check: resident-weight path, [batch, seq, hidden] input.
    out = bert_prediction_head_transform(x, w_t, b, gamma, beta, eps=eps)
    jax.block_until_ready(out)
    ref = reference(x.reshape(-1, hidden), w_t, b, gamma, beta, eps=eps).reshape(x.shape)
    assert out.shape == x.shape
    assert jnp.allclose(out, ref, atol=1e-5, rtol=1e-5), "mismatch vs reference"

    # Ragged token count: exercises the cdiv-grid masked partial last block (no jnp.pad).
    n_ragged = 20
    x_ragged = jax.random.normal(jax.random.PRNGKey(1), (n_ragged, hidden), dtype=jnp.float32)
    out_ragged = bert_prediction_head_transform(x_ragged, w_t, b, gamma, beta, eps=eps)
    jax.block_until_ready(out_ragged)
    ref_ragged = reference(x_ragged, w_t, b, gamma, beta, eps=eps)
    assert out_ragged.shape == (n_ragged, hidden)
    assert jnp.allclose(out_ragged, ref_ragged, atol=1e-5, rtol=1e-5), "mismatch (ragged)"

    # Large-H path: force the K-tiled accumulator variant (2 K steps) to validate it.
    H2 = 256
    kx2, kw2, kb2, kg2, kbt2 = jax.random.split(jax.random.PRNGKey(2), 5)
    x_big = jax.random.normal(kx2, (24, H2), dtype=jnp.float32)
    w_big = jax.random.normal(kw2, (H2, H2), dtype=jnp.float32) * 0.02
    b_big = jax.random.normal(kb2, (H2,), dtype=jnp.float32) * 0.02
    g_big = jnp.ones((H2,), jnp.float32) + 0.01 * jax.random.normal(kg2, (H2,))
    be_big = 0.01 * jax.random.normal(kbt2, (H2,), dtype=jnp.float32)
    out_big = bert_prediction_head_transform(x_big, w_big, b_big, g_big, be_big, eps=eps,
                                             force_k_tiled=True, tile_k=128)
    jax.block_until_ready(out_big)
    ref_big = reference(x_big, w_big, b_big, g_big, be_big, eps=eps)
    assert jnp.allclose(out_big, ref_big, atol=2e-5, rtol=2e-5), "mismatch (k-tiled)"

    print("KERNEL_OK")
</pallas_src>

<mosaic_0001>
module attributes {stable_mosaic.version = 11 : i64} {
  func.func @_resident_kernel(%arg0: i32, %arg1: memref<8x32xf32, #tpu.memory_space<vmem>>, %arg2: memref<32x32xf32, #tpu.memory_space<vmem>>, %arg3: memref<1x32xf32, #tpu.memory_space<vmem>>, %arg4: memref<1x32xf32, #tpu.memory_space<vmem>>, %arg5: memref<1x32xf32, #tpu.memory_space<vmem>>, %arg6: memref<8x32xf32, #tpu.memory_space<vmem>>) attributes {dimension_semantics = [#tpu.dimension_semantics<parallel>], iteration_bounds = array<i64: 2>, scalar_prefetch = 0 : i64, scratch_operands = 0 : i64, tpu.core_type = #tpu.core_type<tc>, window_params = [{transform_indices = @transform_0, window_bounds = array<i64: 8, 32>}, {pipeline_mode = #tpu.pipeline_mode<synchronous>, transform_indices = @transform_1, window_bounds = array<i64: 32, 32>}, {pipeline_mode = #tpu.pipeline_mode<synchronous>, transform_indices = @transform_2, window_bounds = array<i64: 1, 32>}, {pipeline_mode = #tpu.pipeline_mode<synchronous>, transform_indices = @transform_3, window_bounds = array<i64: 1, 32>}, {pipeline_mode = #tpu.pipeline_mode<synchronous>, transform_indices = @transform_4, window_bounds = array<i64: 1, 32>}, {transform_indices = @transform_5, window_bounds = array<i64: 8, 32>}]} {
    %c0 = arith.constant 0 : index
    %c0_0 = arith.constant 0 : index
    %0 = vector.load %arg1[%c0, %c0_0] : memref<8x32xf32, #tpu.memory_space<vmem>>, vector<8x32xf32>
    %c0_1 = arith.constant 0 : index
    %c0_2 = arith.constant 0 : index
    %1 = vector.load %arg2[%c0_1, %c0_2] : memref<32x32xf32, #tpu.memory_space<vmem>>, vector<32x32xf32>
    %cst = arith.constant dense<0.000000e+00> : vector<8x32xf32>
    %2 = tpu.matmul %0, %1, %cst {dimension_numbers = #tpu.dot_dimension_numbers<[1], [0], [0], [1], [0, 0, 1, 1], [], []>} : vector<8x32xf32>, vector<32x32xf32>, vector<8x32xf32> -> vector<8x32xf32>
    %c0_3 = arith.constant 0 : index
    %c0_4 = arith.constant 0 : index
    %3 = vector.load %arg3[%c0_3, %c0_4] : memref<1x32xf32, #tpu.memory_space<vmem>>, vector<1x32xf32>
    %4 = vector.broadcast %3 : vector<1x32xf32> to vector<8x32xf32>
    %5 = arith.addf %2, %4 : vector<8x32xf32>
    %c0_5 = arith.constant 0 : index
    %c0_6 = arith.constant 0 : index
    %6 = vector.load %arg4[%c0_5, %c0_6] : memref<1x32xf32, #tpu.memory_space<vmem>>, vector<1x32xf32>
    %c0_7 = arith.constant 0 : index
    %c0_8 = arith.constant 0 : index
    %7 = vector.load %arg5[%c0_7, %c0_8] : memref<1x32xf32, #tpu.memory_space<vmem>>, vector<1x32xf32>
    %cst_9 = arith.constant 5.000000e-01 : f32
    %8 = vector.broadcast %cst_9 : f32 to vector<8x32xf32>
    %9 = arith.mulf %5, %8 : vector<8x32xf32>
    %cst_10 = arith.constant 0.707106769 : f32
    %10 = vector.broadcast %cst_10 : f32 to vector<8x32xf32>
    %11 = arith.mulf %5, %10 : vector<8x32xf32>
    %12 = math.erf %11 : vector<8x32xf32>
    %cst_11 = arith.constant 1.000000e+00 : f32
    %13 = vector.broadcast %cst_11 : f32 to vector<8x32xf32>
    %14 = arith.addf %13, %12 : vector<8x32xf32>
    %15 = arith.mulf %9, %14 : vector<8x32xf32>
    %cst_12 = arith.constant dense<0.000000e+00> : vector<8xf32>
    %16 = vector.multi_reduction <add>, %15, %cst_12 [1] : vector<8x32xf32> to vector<8xf32>
    %17 = vector.shape_cast %16 : vector<8xf32> to vector<8x1xf32>
    %cst_13 = arith.constant 3.125000e-02 : f32
    %18 = vector.broadcast %cst_13 : f32 to vector<8x1xf32>
    %19 = arith.mulf %17, %18 : vector<8x1xf32>
    %20 = vector.broadcast %19 : vector<8x1xf32> to vector<8x32xf32>
    %21 = arith.subf %15, %20 : vector<8x32xf32>
    %22 = arith.mulf %21, %21 : vector<8x32xf32>
    %cst_14 = arith.constant dense<0.000000e+00> : vector<8xf32>
    %23 = vector.multi_reduction <add>, %22, %cst_14 [1] : vector<8x32xf32> to vector<8xf32>
    %24 = vector.shape_cast %23 : vector<8xf32> to vector<8x1xf32>
    %cst_15 = arith.constant 3.125000e-02 : f32
    %25 = vector.broadcast %cst_15 : f32 to vector<8x1xf32>
    %26 = arith.mulf %24, %25 : vector<8x1xf32>
    %cst_16 = arith.constant 9.99999996E-13 : f32
    %27 = vector.broadcast %cst_16 : f32 to vector<8x1xf32>
    %28 = arith.addf %26, %27 : vector<8x1xf32>
    %29 = math.rsqrt %28 : vector<8x1xf32>
    %30 = vector.broadcast %29 : vector<8x1xf32> to vector<8x32xf32>
    %31 = arith.mulf %21, %30 : vector<8x32xf32>
    %32 = vector.broadcast %6 : vector<1x32xf32> to vector<8x32xf32>
    %33 = arith.mulf %31, %32 : vector<8x32xf32>
    %34 = vector.broadcast %7 : vector<1x32xf32> to vector<8x32xf32>
    %35 = arith.addf %33, %34 : vector<8x32xf32>
    %c0_17 = arith.constant 0 : index
    %c0_18 = arith.constant 0 : index
    %36 = vector.load %arg6[%c0_17, %c0_18] : memref<8x32xf32, #tpu.memory_space<vmem>>, vector<8x32xf32>
    tpu.vector_store %arg6[%c0_17, %c0_18], %35 {strides = array<i32>} : memref<8x32xf32, #tpu.memory_space<vmem>>, vector<8x32xf32>,
    return
  }
  func.func @transform_0(%arg0: i32) -> (i32, i32) {
    %c0_i32 = arith.constant 0 : i32
    %c0_i32_0 = arith.constant 0 : i32
    return %arg0, %c0_i32 : i32, i32
  }
  func.func @transform_1(%arg0: i32) -> (i32, i32) {
    %c0_i32 = arith.constant 0 : i32
    %c0_i32_0 = arith.constant 0 : i32
    %c0_i32_1 = arith.constant 0 : i32
    return %c0_i32, %c0_i32_0 : i32, i32
  }
  func.func @transform_2(%arg0: i32) -> (i32, i32) {
    %c0_i32 = arith.constant 0 : i32
    %c0_i32_0 = arith.constant 0 : i32
    %c0_i32_1 = arith.constant 0 : i32
    return %c0_i32, %c0_i32_0 : i32, i32
  }
  func.func @transform_3(%arg0: i32) -> (i32, i32) {
    %c0_i32 = arith.constant 0 : i32
    %c0_i32_0 = arith.constant 0 : i32
    %c0_i32_1 = arith.constant 0 : i32
    return %c0_i32, %c0_i32_0 : i32, i32
  }
  func.func @transform_4(%arg0: i32) -> (i32, i32) {
    %c0_i32 = arith.constant 0 : i32
    %c0_i32_0 = arith.constant 0 : i32
    %c0_i32_1 = arith.constant 0 : i32
    return %c0_i32, %c0_i32_0 : i32, i32
  }
  func.func @transform_5(%arg0: i32) -> (i32, i32) {
    %c0_i32 = arith.constant 0 : i32
    %c0_i32_0 = arith.constant 0 : i32
    return %arg0, %c0_i32 : i32, i32
  }
}

module attributes {stable_mosaic.version = 11 : i64} {
  func.func @_resident_kernel(%arg0: i32, %arg1: memref<8x32xf32, #tpu.memory_space<vmem>>, %arg2: memref<32x32xf32, #tpu.memory_space<vmem>>, %arg3: memref<1x32xf32, #tpu.memory_space<vmem>>, %arg4: memref<1x32xf32, #tpu.memory_space<vmem>>, %arg5: memref<1x32xf32, #tpu.memory_space<vmem>>, %arg6: memref<8x32xf32, #tpu.memory_space<vmem>>) attributes {dimension_semantics = [#tpu.dimension_semantics<parallel>], iteration_bounds = array<i64: 2>, scalar_prefetch = 0 : i64, scratch_operands = 0 : i64, tpu.core_type = #tpu.core_type<tc>, window_params = [{transform_indices = @transform_0, window_bounds = array<i64: 8, 32>}, {pipeline_mode = #tpu.pipeline_mode<synchronous>, transform_indices = @transform_1, window_bounds = array<i64: 32, 32>}, {pipeline_mode = #tpu.pipeline_mode<synchronous>, transform_indices = @transform_2, window_bounds = array<i64: 1, 32>}, {pipeline_mode = #tpu.pipeline_mode<synchronous>, transform_indices = @transform_3, window_bounds = array<i64: 1, 32>}, {pipeline_mode = #tpu.pipeline_mode<synchronous>, transform_indices = @transform_4, window_bounds = array<i64: 1, 32>}, {transform_indices = @transform_5, window_bounds = array<i64: 8, 32>}]} {
    %c0 = arith.constant 0 : index
    %c0_0 = arith.constant 0 : index
    %0 = vector.load %arg1[%c0, %c0_0] : memref<8x32xf32, #tpu.memory_space<vmem>>, vector<8x32xf32>
    %c0_1 = arith.constant 0 : index
    %c0_2 = arith.constant 0 : index
    %1 = vector.load %arg2[%c0_1, %c0_2] : memref<32x32xf32, #tpu.memory_space<vmem>>, vector<32x32xf32>
    %cst = arith.constant dense<0.000000e+00> : vector<8x32xf32>
    %2 = tpu.matmul %0, %1, %cst {dimension_numbers = #tpu.dot_dimension_numbers<[1], [0], [0], [1], [0, 0, 1, 1], [], []>} : vector<8x32xf32>, vector<32x32xf32>, vector<8x32xf32> -> vector<8x32xf32>
    %c0_3 = arith.constant 0 : index
    %c0_4 = arith.constant 0 : index
    %3 = vector.load %arg3[%c0_3, %c0_4] : memref<1x32xf32, #tpu.memory_space<vmem>>, vector<1x32xf32>
    %4 = vector.broadcast %3 : vector<1x32xf32> to vector<8x32xf32>
    %5 = arith.addf %2, %4 : vector<8x32xf32>
    %c0_5 = arith.constant 0 : index
    %c0_6 = arith.constant 0 : index
    %6 = vector.load %arg4[%c0_5, %c0_6] : memref<1x32xf32, #tpu.memory_space<vmem>>, vector<1x32xf32>
    %c0_7 = arith.constant 0 : index
    %c0_8 = arith.constant 0 : index
    %7 = vector.load %arg5[%c0_7, %c0_8] : memref<1x32xf32, #tpu.memory_space<vmem>>, vector<1x32xf32>
    %cst_9 = arith.constant 5.000000e-01 : f32
    %8 = vector.broadcast %cst_9 : f32 to vector<8x32xf32>
    %9 = arith.mulf %5, %8 : vector<8x32xf32>
    %cst_10 = arith.constant 0.707106769 : f32
    %10 = vector.broadcast %cst_10 : f32 to vector<8x32xf32>
    %11 = arith.mulf %5, %10 : vector<8x32xf32>
    %12 = math.erf %11 : vector<8x32xf32>
    %cst_11 = arith.constant 1.000000e+00 : f32
    %13 = vector.broadcast %cst_11 : f32 to vector<8x32xf32>
    %14 = arith.addf %13, %12 : vector<8x32xf32>
    %15 = arith.mulf %9, %14 : vector<8x32xf32>
    %cst_12 = arith.constant dense<0.000000e+00> : vector<8xf32>
    %16 = vector.multi_reduction <add>, %15, %cst_12 [1] : vector<8x32xf32> to vector<8xf32>
    %17 = vector.shape_cast %16 : vector<8xf32> to vector<8x1xf32>
    %cst_13 = arith.constant 3.125000e-02 : f32
    %18 = vector.broadcast %cst_13 : f32 to vector<8x1xf32>
    %19 = arith.mulf %17, %18 : vector<8x1xf32>
    %20 = vector.broadcast %19 : vector<8x1xf32> to vector<8x32xf32>
    %21 = arith.subf %15, %20 : vector<8x32xf32>
    %22 = arith.mulf %21, %21 : vector<8x32xf32>
    %cst_14 = arith.constant dense<0.000000e+00> : vector<8xf32>
    %23 = vector.multi_reduction <add>, %22, %cst_14 [1] : vector<8x32xf32> to vector<8xf32>
    %24 = vector.shape_cast %23 : vector<8xf32> to vector<8x1xf32>
    %cst_15 = arith.constant 3.125000e-02 : f32
    %25 = vector.broadcast %cst_15 : f32 to vector<8x1xf32>
    %26 = arith.mulf %24, %25 : vector<8x1xf32>
    %cst_16 = arith.constant 9.99999996E-13 : f32
    %27 = vector.broadcast %cst_16 : f32 to vector<8x1xf32>
    %28 = arith.addf %26, %27 : vector<8x1xf32>
    %29 = math.rsqrt %28 : vector<8x1xf32>
    %30 = vector.broadcast %29 : vector<8x1xf32> to vector<8x32xf32>
    %31 = arith.mulf %21, %30 : vector<8x32xf32>
    %32 = vector.broadcast %6 : vector<1x32xf32> to vector<8x32xf32>
    %33 = arith.mulf %31, %32 : vector<8x32xf32>
    %34 = vector.broadcast %7 : vector<1x32xf32> to vector<8x32xf32>
    %35 = arith.addf %33, %34 : vector<8x32xf32>
    %c0_17 = arith.constant 0 : index
    %c0_18 = arith.constant 0 : index
    %36 = vector.load %arg6[%c0_17, %c0_18] : memref<8x32xf32, #tpu.memory_space<vmem>>, vector<8x32xf32>
    tpu.vector_store %arg6[%c0_17, %c0_18], %35 {strides = array<i32>} : memref<8x32xf32, #tpu.memory_space<vmem>>, vector<8x32xf32>,
    return
  }
  func.func @transform_0(%arg0: i32) -> (i32, i32) {
    %c0_i32 = arith.constant 0 : i32
    %c0_i32_0 = arith.constant 0 : i32
    return %arg0, %c0_i32 : i32, i32
  }
  func.func @transform_1(%arg0: i32) -> (i32, i32) {
    %c0_i32 = arith.constant 0 : i32
    %c0_i32_0 = arith.constant 0 : i32
    %c0_i32_1 = arith.constant 0 : i32
    return %c0_i32, %c0_i32_0 : i32, i32
  }
  func.func @transform_2(%arg0: i32) -> (i32, i32) {
    %c0_i32 = arith.constant 0 : i32
    %c0_i32_0 = arith.constant 0 : i32
    %c0_i32_1 = arith.constant 0 : i32
    return %c0_i32, %c0_i32_0 : i32, i32
  }
  func.func @transform_3(%arg0: i32) -> (i32, i32) {
    %c0_i32 = arith.constant 0 : i32
    %c0_i32_0 = arith.constant 0 : i32
    %c0_i32_1 = arith.constant 0 : i32
    return %c0_i32, %c0_i32_0 : i32, i32
  }
  func.func @transform_4(%arg0: i32) -> (i32, i32) {
    %c0_i32 = arith.constant 0 : i32
    %c0_i32_0 = arith.constant 0 : i32
    %c0_i32_1 = arith.constant 0 : i32
    return %c0_i32, %c0_i32_0 : i32, i32
  }
  func.func @transform_5(%arg0: i32) -> (i32, i32) {
    %c0_i32 = arith.constant 0 : i32
    %c0_i32_0 = arith.constant 0 : i32
    return %arg0, %c0_i32 : i32, i32
  }
}

</mosaic_0001>

<llo_original>
// kernel: tpu_custom_call.1
$region0: #{tpu_custom_call.1}
  #allocation0 [shape = 'u32[]', space=smem, size = 0x4, offset = 0x4, fixed_abs, tag = 'smem constant byte address 0x4 - core index']
  #allocation1 [shape = 'u32[144,128]{1,0:T(1,128)}', space=vmem, size = 0x12000, scoped, tag = 'internal scratch']
  %s0 = inlined_call_operand.hbm [shape: f32[16,32], index: 0, kind: input, shape index: {}]
  %s1 = inlined_call_operand.hbm [shape: f32[32,32], index: 1, kind: input, shape index: {}]
  %s2 = inlined_call_operand.vmem [shape: f32[1,32], index: 2, kind: input, shape index: {}]
  %s3 = inlined_call_operand.vmem [shape: f32[1,32], index: 3, kind: input, shape index: {}]
  %s4 = inlined_call_operand.vmem [shape: f32[1,32], index: 4, kind: input, shape index: {}]
  %s5 = inlined_call_operand.hbm [shape: f32[16,32], index: 5, kind: output, shape index: {}]
  %s6 = sld [smem:[#allocation0]]
  $region61: #{tpu_custom_call.1} parent=0
    _
  %s8 = ssub.s32 1, %s6
  %s9 = scalar_select 0, %s8, %s6
  $region1: #{tpu_custom_call.1} parent=0
    #allocation2 [shape = 'u8[8192]{0}', space=vmem, size = 0x2000, scoped, tag = 'input window, operand 0']
    #allocation3 [shape = 's32[2]{0}', space=sflag, size = 0x8, scoped, tag = 'scoped memory for tpu_custom_call.1']
    #allocation4 [shape = 's32[2]{0}', space=sflag, size = 0x8, scoped, tag = 'scoped memory for tpu_custom_call.1']
    #allocation5 [shape = 'u8[16384]{0}', space=vmem, size = 0x4000, scoped, tag = 'input window, operand 1, single buffered']
    #allocation6 [shape = 's32[1]{0}', space=sflag, size = 0x4, scoped, tag = 'scoped memory for tpu_custom_call.1']
    #allocation7 [shape = 'u8[8192]{0}', space=vmem, size = 0x2000, scoped, tag = 'output window, operand 0']
    %10 = vsyncpa [#allocation3], 0
    %s11 = scalar_lea.sflag [#allocation3], 1
    %12 = vsyncpa %s11, 0
    %13 = vsyncpa [#allocation6], 0
    %14 = vsyncpa [#allocation4], 0
    %s15 = scalar_lea.sflag [#allocation4], 1
    %16 = vsyncpa %s15, 0
    loop: start=0, step=1, limit=4
    $region2: #{tpu_custom_call.1} parent=1 // loop_pre_header
      _
    $region3: #{tpu_custom_call.1} parent=1 // loop_header
      %s18 = sphi 0, %s22
      %p19 = scmp.ge.s32.totalorder %s18, 4
      %s28 = sphi 0, %s30
      %s31 = sphi 0, %s28
      %s32 = sphi 0, %s31
      %s48 = sphi 0, %s32
      %s52 = sphi 0, %s52
      %s54 = sphi 0, %s52
      %s55 = sphi 0, %s54
      %s69 = sphi 0, %s55
      %s73 = sphi 0, %s73
      %s75 = sphi 0, %s73
      %s76 = sphi 0, %s75
      %s90 = sphi 0, %s76
      %s94 = sphi 0, %s94
      %s96 = sphi 0, %s94
      %s97 = sphi 0, %s96
      %s111 = sphi 0, %s97
      %s115 = sphi 0, %s115
      %s117 = sphi 0, %s115
      %s118 = sphi 0, %s117
      %s132 = sphi 0, %s118
      %s138 = sphi 0, %s140
      %s141 = sphi 0, %s138
      %s142 = sphi 0, %s141
      %s158 = sphi 0, %s142
    $region4: #{tpu_custom_call.1} parent=1 // loop_header_branch
      %21 = sbr.rel (%p19) target = $region8
    $region5: #{tpu_custom_call.1} parent=1 // loop_body
      %s23 = ssub.s32 %s18, 1
      %s24 = ssub.s32 %s18, 2
      %s25 = sadd.s32 %s18, 1
      %s26 = ssub.s32 %s18, %s25
      %p27 = scmp.eq.s32.totalorder %s26, 0
      %s29 = sadd.s32 %s28, 1
      %s30 = scalar_select %p27, %s28, %s29
      %p33 = pneg %p27
      %p34 = scmp.eq.s32.totalorder %s18, 1
      %p35 = por %p33, %p34
      %p36 = scmp.ne.s32.totalorder %s28, %s31
      %p37 = scmp.eq.s32.totalorder %s18, 0
      %p38 = por %p36, %p37
      %p39 = scmp.ne.s32.totalorder %s28, %s31
      %p40 = scmp.eq.s32.totalorder %s23, 1
      %p41 = por %p39, %p40
      %p42 = scmp.ne.s32.totalorder %s31, %s32
      %p43 = scmp.eq.s32.totalorder %s23, 0
      %p44 = por %p42, %p43
      %p45 = scmp.ne.s32.totalorder %s31, %s32
      %p46 = scmp.eq.s32.totalorder %s24, 1
      %p47 = por %p45, %p46
      %p49 = scmp.ne.s32.totalorder %s32, %s48
      %p50 = scmp.eq.s32.totalorder %s24, 0
      %p51 = por %p49, %p50
      %s53 = sadd.s32 %s52, 1
      %p56 = scmp.eq.s32.totalorder %s18, 1
      %p57 = scmp.ne.s32.totalorder %s52, %s54
      %p58 = scmp.eq.s32.totalorder %s18, 0
      %p59 = por %p57, %p58
      %p60 = scmp.ne.s32.totalorder %s52, %s54
      %p61 = scmp.eq.s32.totalorder %s23, 1
      %p62 = por %p60, %p61
      %p63 = scmp.ne.s32.totalorder %s54, %s55
      %p64 = scmp.eq.s32.totalorder %s23, 0
      %p65 = por %p63, %p64
      %p66 = scmp.ne.s32.totalorder %s54, %s55
      %p67 = scmp.eq.s32.totalorder %s24, 1
      %p68 = por %p66, %p67
      %p70 = scmp.ne.s32.totalorder %s55, %s69
      %p71 = scmp.eq.s32.totalorder %s24, 0
      %p72 = por %p70, %p71
      %s74 = sadd.s32 %s73, 1
      %p77 = scmp.eq.s32.totalorder %s18, 1
      %p78 = scmp.ne.s32.totalorder %s73, %s75
      %p79 = scmp.eq.s32.totalorder %s18, 0
      %p80 = por %p78, %p79
      %p81 = scmp.ne.s32.totalorder %s73, %s75
      %p82 = scmp.eq.s32.totalorder %s23, 1
      %p83 = por %p81, %p82
      %p84 = scmp.ne.s32.totalorder %s75, %s76
      %p85 = scmp.eq.s32.totalorder %s23, 0
      %p86 = por %p84, %p85
      %p87 = scmp.ne.s32.totalorder %s75, %s76
      %p88 = scmp.eq.s32.totalorder %s24, 1
      %p89 = por %p87, %p88
      %p91 = scmp.ne.s32.totalorder %s76, %s90
      %p92 = scmp.eq.s32.totalorder %s24, 0
      %p93 = por %p91, %p92
      %s95 = sadd.s32 %s94, 1
      %p98 = scmp.eq.s32.totalorder %s18, 1
      %p99 = scmp.ne.s32.totalorder %s94, %s96
      %p100 = scmp.eq.s32.totalorder %s18, 0
      %p101 = por %p99, %p100
      %p102 = scmp.ne.s32.totalorder %s94, %s96
      %p103 = scmp.eq.s32.totalorder %s23, 1
      %p104 = por %p102, %p103
      %p105 = scmp.ne.s32.totalorder %s96, %s97
      %p106 = scmp.eq.s32.totalorder %s23, 0
      %p107 = por %p105, %p106
      %p108 = scmp.ne.s32.totalorder %s96, %s97
      %p109 = scmp.eq.s32.totalorder %s24, 1
      %p110 = por %p108, %p109
      %p112 = scmp.ne.s32.totalorder %s97, %s111
      %p113 = scmp.eq.s32.totalorder %s24, 0
      %p114 = por %p112, %p113
      %s116 = sadd.s32 %s115, 1
      %p119 = scmp.eq.s32.totalorder %s18, 1
      %p120 = scmp.ne.s32.totalorder %s115, %s117
      %p121 = scmp.eq.s32.totalorder %s18, 0
      %p122 = por %p120, %p121
      %p123 = scmp.ne.s32.totalorder %s115, %s117
      %p124 = scmp.eq.s32.totalorder %s23, 1
      %p125 = por %p123, %p124
      %p126 = scmp.ne.s32.totalorder %s117, %s118
      %p127 = scmp.eq.s32.totalorder %s23, 0
      %p128 = por %p126, %p127
      %p129 = scmp.ne.s32.totalorder %s117, %s118
      %p130 = scmp.eq.s32.totalorder %s24, 1
      %p131 = por %p129, %p130
      %p133 = scmp.ne.s32.totalorder %s118, %s132
      %p134 = scmp.eq.s32.totalorder %s24, 0
      %p135 = por %p133, %p134
      %s136 = ssub.s32 %s18, %s25
      %p137 = scmp.eq.s32.totalorder %s136, 0
      %s139 = sadd.s32 %s138, 1
      %s140 = scalar_select %p137, %s138, %s139
      %p143 = pneg %p137
      %p144 = scmp.eq.s32.totalorder %s18, 1
      %p145 = por %p143, %p144
      %p146 = scmp.ne.s32.totalorder %s138, %s141
      %p147 = scmp.eq.s32.totalorder %s18, 0
      %p148 = por %p146, %p147
      %p149 = scmp.ne.s32.totalorder %s138, %s141
      %p150 = scmp.eq.s32.totalorder %s23, 1
      %p151 = por %p149, %p150
      %p152 = scmp.ne.s32.totalorder %s141, %s142
      %p153 = scmp.eq.s32.totalorder %s23, 0
      %p154 = por %p152, %p153
      %p155 = scmp.ne.s32.totalorder %s141, %s142
      %p156 = scmp.eq.s32.totalorder %s24, 1
      %p157 = por %p155, %p156
      %p159 = scmp.ne.s32.totalorder %s142, %s158
      %p160 = scmp.eq.s32.totalorder %s24, 0
      %p161 = por %p159, %p160
      %p162 = scmp.le.s32.totalorder 1, %s18
      %p163 = scmp.lt.s32.totalorder %s18, 3
      %p164 = pnand %p162, %p163
      %p165 = pneg %p164
      // Predicated region
      $region9: #{tpu_custom_call.1} parent=5 // pred_check
        _
      $region10: #{tpu_custom_call.1} parent=5 // pred_check_branch
        %167 = sbr.rel (%p164) target = $region12
      $region11: #{tpu_custom_call.1} parent=5 // pred_region
        %s168 = ssub.s32 %s18, 1
        // Predicated region
        $region13: #{tpu_custom_call.1} parent=11 // pred_check
          %p169 = pneg %p65
        $region14: #{tpu_custom_call.1} parent=11 // pred_check_branch
          %171 = sbr.rel (%p169) target = $region16
        $region15: #{tpu_custom_call.1} parent=11 // pred_region
          %s173 = ssub.s32 512, 512
          %174 = vsyncadd [#allocation6], %s173
          %s175 = sshll.u32 [#allocation5], 4
          %s176 = int_to_ptr.vmem [resolvable:$true] %s175
          %181 = dma.hbm_to_vmem [thread:$0]  %s1, 512, %s176, [#allocation6], 128, 128, 8
        $region16: #{tpu_custom_call.1} parent=11 // pred_fallthru
          _
        // Predicated region
        $region17: #{tpu_custom_call.1} parent=11 // pred_check
          %p182 = pneg %p86
        $region18: #{tpu_custom_call.1} parent=11 // pred_check_branch
          %184 = sbr.rel (%p182) target = $region20
        $region19: #{tpu_custom_call.1} parent=11 // pred_region
          _
        $region20: #{tpu_custom_call.1} parent=11 // pred_fallthru
          _
        // Predicated region
        $region21: #{tpu_custom_call.1} parent=11 // pred_check
          %p185 = pneg %p107
        $region22: #{tpu_custom_call.1} parent=11 // pred_check_branch
          %187 = sbr.rel (%p185) target = $region24
        $region23: #{tpu_custom_call.1} parent=11 // pred_region
          _
        $region24: #{tpu_custom_call.1} parent=11 // pred_fallthru
          _
        // Predicated region
        $region25: #{tpu_custom_call.1} parent=11 // pred_check
          %p188 = pneg %p128
        $region26: #{tpu_custom_call.1} parent=11 // pred_check_branch
          %190 = sbr.rel (%p188) target = $region28
        $region27: #{tpu_custom_call.1} parent=11 // pred_region
          _
        $region28: #{tpu_custom_call.1} parent=11 // pred_fallthru
          _
      $region12: #{tpu_custom_call.1} parent=5 // pred_fallthru
        _
      %p191 = scmp.lt.s32.totalorder %s18, 2
      // Predicated region
      $region29: #{tpu_custom_call.1} parent=5 // pred_check
        %p192 = pneg %p191
      $region30: #{tpu_custom_call.1} parent=5 // pred_check_branch
        %194 = sbr.rel (%p192) target = $region32
      $region31: #{tpu_custom_call.1} parent=5 // pred_region
        // Predicated region
        $region33: #{tpu_custom_call.1} parent=31 // pred_check
          %p195 = pneg %p38
        $region34: #{tpu_custom_call.1} parent=31 // pred_check_branch
          %197 = sbr.rel (%p195) target = $region36
        $region35: #{tpu_custom_call.1} parent=31 // pred_region
          %s198 = sand.u32 %s28, 1
          %s199 = scalar_lea.sflag [#allocation3], %s198
          %s200 = sand.u32 %s28, 1
          %s201 = smul.addr %s200, 8
          %s202 = scalar_lea.vmem [#allocation2], %s201
          %s204 = ssub.s32 128, 128
          %205 = vsyncadd %s199, %s204
          %s206 = smul.addr %s18, 128
          %s207 = scalar_lea.hbm %s0, %s206
          %s209 = sshll.u32 %s202, 4
          %s210 = int_to_ptr.vmem [resolvable:$true] %s209
          %212 = dma.hbm_to_vmem [thread:$0]  %s207, 128, %s210, %s199
        $region36: #{tpu_custom_call.1} parent=31 // pred_fallthru
          _
      $region32: #{tpu_custom_call.1} parent=5 // pred_fallthru
        _
      %p213 = scmp.le.s32.totalorder 1, %s18
      %p214 = scmp.lt.s32.totalorder %s18, 3
      %p215 = pnand %p213, %p214
      %p216 = pneg %p215
      // Predicated region
      $region37: #{tpu_custom_call.1} parent=5 // pred_check
        _
      $region38: #{tpu_custom_call.1} parent=5 // pred_check_branch
        %218 = sbr.rel (%p215) target = $region40
      $region39: #{tpu_custom_call.1} parent=5 // pred_region
        %s219 = ssub.s32 %s18, 1
        %s220 = sand.u32 %s31, 1
        %s221 = scalar_lea.sflag [#allocation3], %s220
        %s222 = sand.u32 %s31, 1
        %s223 = smul.addr %s222, 8
        %s224 = scalar_lea.vmem [#allocation2], %s223
        // Predicated region
        $region41: #{tpu_custom_call.1} parent=39 // pred_check
          %p225 = pneg %p44
        $region42: #{tpu_custom_call.1} parent=39 // pred_check_branch
          %227 = sbr.rel (%p225) target = $region44
        $region43: #{tpu_custom_call.1} parent=39 // pred_region
          %228 = dma.done %s221, 128
        $region44: #{tpu_custom_call.1} parent=39 // pred_fallthru
          _
        // Predicated region
        $region45: #{tpu_custom_call.1} parent=39 // pred_check
          %p229 = pneg %p65
        $region46: #{tpu_custom_call.1} parent=39 // pred_check_branch
          %231 = sbr.rel (%p229) target = $region48
        $region47: #{tpu_custom_call.1} parent=39 // pred_region
          %232 = dma.done [#allocation6], 512
        $region48: #{tpu_custom_call.1} parent=39 // pred_fallthru
          _
        %s233 = sand.u32 %s31, 1
        %s234 = scalar_lea.sflag [#allocation3], %s233
        %s235 = sand.u32 %s31, 1
        %s236 = smul.addr %s235, 8
        %s237 = scalar_lea.vmem [#allocation2], %s236
        %p238 = pneg %p44
        %p239 = pneg %p41
        %p240 = pneg %p65
        %p241 = pneg %p62
        %p242 = pneg %p86
        %p243 = pneg %p83
        %p244 = pneg %p107
        %p245 = pneg %p104
        %p246 = pneg %p128
        %p247 = pneg %p125
        %p248 = pneg %p154
        %p249 = pneg %p151
        %s250 = sand.u32 %s141, 1
        %s251 = scalar_lea.sflag [#allocation4], %s250
        %s252 = sand.u32 %s141, 1
        %s253 = smul.addr %s252, 8
        %s254 = scalar_lea.vmem [#allocation7], %s253
        %v255 = vld [vmem:[%s224] sm:$0xff]
        %v256 = vld [vmem:[#allocation5] sm:$0xff]
        %v257 = vld [vmem:[#allocation5 + $0x8] sm:$0xff]
        %v258 = vld [vmem:[#allocation5 + $0x10] sm:$0xff]
        %v259 = vld [vmem:[#allocation5 + $0x18] sm:$0xff]
        %v260 = vld [vmem:[%s2] sm:$0x1]
        %v262 = vlaneseq
        %v263 = vshrl.u32 %v262, 7
        %v264 = vsub.s32 0, %v263
        %v265 = vrot.slane %v260, %v264
        %vm267 = vcmask 261120
        %v269 = vsel %vm267, %v255, 0
        %271 = vmatprep.subr.mxu0 0.0
        %272 = vmatpush1.msra.mxu0 %v256
        %273 = vmatprep.subr.mxu0 0.0
        %274 = vmatpush1.msra.mxu0 %v257
        %275 = vmatprep.subr.mxu0 0.0
        %276 = vmatpush1.msra.mxu0 %v258
        %277 = vmatprep.subr.mxu0 0.0
        %278 = vmatpush1.msra.mxu0 %v259
        %279 = vmatprep.subr.mxu0 0.0
        %280 = vmatpush1.msra.mxu0 0.0
        %281 = vmatprep.subr.mxu0 0.0
        %282 = vmatpush1.msra.mxu0 0.0
        %283 = vmatprep.subr.mxu0 0.0
        %284 = vmatpush1.msra.mxu0 0.0
        %285 = vmatprep.subr.mxu0 0.0
        %286 = vmatpush1.msra.mxu0 0.0
        %287 = vmatprep.subr.mxu0 0.0
        %288 = vmatpush1.msra.mxu0 0.0
        %289 = vmatprep.subr.mxu0 0.0
        %290 = vmatpush1.msra.mxu0 0.0
        %291 = vmatprep.subr.mxu0 0.0
        %292 = vmatpush1.msra.mxu0 0.0
        %293 = vmatprep.subr.mxu0 0.0
        %294 = vmatpush1.msra.mxu0 0.0
        %295 = vmatprep.subr.mxu0 0.0
        %296 = vmatpush1.msra.mxu0 0.0
        %297 = vmatprep.subr.mxu0 0.0
        %298 = vmatpush1.msra.mxu0 0.0
        %299 = vmatprep.subr.mxu0 0.0
        %300 = vmatpush1.msra.mxu0 0.0
        %301 = vmatprep.subr.mxu0 0.0
        %302 = vmatpush1.msra.mxu0 0.0
        %303 = vmatprep.subr.mxu0 0.0
        %304 = vmatpush1.msra.mxu0 0.0
        %305 = vmatprep.subr.mxu0 0.0
        %306 = vmatpush1.msra.mxu0 0.0
        %307 = vmatprep.subr.mxu0 0.0
        %308 = vmatpush1.msra.mxu0 0.0
        %309 = vmatprep.subr.mxu0 0.0
        %310 = vmatpush1.msra.mxu0 0.0
        %311 = vmatprep.subr.mxu0 0.0
        %312 = vmatpush1.msra.mxu0 0.0
        %313 = vmatprep.subr.mxu0 0.0
        %314 = vmatpush1.msra.mxu0 0.0
        %315 = vmatprep.subr.mxu0 0.0
        %316 = vmatpush1.msra.mxu0 0.0
        %317 = vmatprep.subr.mxu0 0.0
        %318 = vmatpush1.msra.mxu0 0.0
        %319 = vmatprep.subr.mxu0 0.0
        %320 = vmatpush1.msra.mxu0 0.0
        %321 = vmatprep.subr.mxu0 0.0
        %322 = vmatpush1.msra.mxu0 0.0
        %323 = vmatprep.subr.mxu0 0.0
        %324 = vmatpush1.msra.mxu0 0.0
        %325 = vmatprep.subr.mxu0 0.0
        %326 = vmatpush1.msra.mxu0 0.0
        %327 = vmatprep.subr.mxu0 0.0
        %328 = vmatpush1.msra.mxu0 0.0
        %329 = vmatprep.subr.mxu0 0.0
        %330 = vmatpush1.msra.mxu0 0.0
        %331 = vmatprep.subr.mxu0 0.0
        %332 = vmatpush1.msra.mxu0 0.0
        %333 = vmatprep.subr.mxu0 0.0
        %334 = vmatpush1.msra.mxu0 0.0
        %335 = vmatprep.mubr.f32.mxu0 0.0
        %336 = vmatmul.mubr.f32.gmra.mrb[0].mxu0 %v269
        %v337 = vpop.f32.mrb[0].mxu0
        %v338 = vadd.f32 %v265, %v337
        %v339 = vpop.f32.mrb[0].mxu0
        %340 = vdwg.mxu0
        %v341 = vld [vmem:[%s3] sm:$0x1]
        %v342 = vld [vmem:[%s4] sm:$0x1]
        %v343 = vmul.f32 %v338, 0.5
        %v344 = vmul.f32 %v338, 0.70710677
        %v345 = verf.f32.pop %v344
        %v346 = vadd.f32 %v345, 1.0
        %v347 = vmul.f32 %v343, %v346
        %v348 = vsel %vm267, %v347, 0.0
        %349 = vadd.xlane.f32.xlu0 %v348
        %v350 = vpop.xlane.xlu0 %349
        %v351 = vmul.f32 %v350, 0.03125
        %v352 = vsub.f32 %v347, %v351
        %v353 = vmul.f32 %v352, %v352
        %v354 = vsel %vm267, %v353, 0.0
        %355 = vadd.xlane.f32.xlu0 %v354
        %v356 = vpop.xlane.xlu0 %355
        %v357 = vmul.f32 %v356, 0.03125
        %v358 = vadd.f32 %v357, 1e-12
        %v359 = vrsqrt.pop %v358
        %v360 = vmul.f32 %v352, %v359
        %v362 = vlaneseq
        %v363 = vshrl.u32 %v362, 7
        %v364 = vsub.s32 0, %v363
        %v365 = vrot.slane %v341, %v364
        %v367 = vmul.f32 %v360, %v365
        %v369 = vlaneseq
        %v370 = vshrl.u32 %v369, 7
        %v371 = vsub.s32 0, %v370
        %v372 = vrot.slane %v342, %v371
        %v374 = vadd.f32 %v367, %v372
        %375 = vst.msk [vmem:[%s254] sm:$0xff] %vm267, %v374
        %s376 = sand.u32 %s141, 1
        %s377 = scalar_lea.sflag [#allocation4], %s376
        %s378 = sand.u32 %s141, 1
        %s379 = smul.addr %s378, 8
        %s380 = scalar_lea.vmem [#allocation7], %s379
        // Predicated region
        $region49: #{tpu_custom_call.1} parent=39 // pred_check
          %p381 = pneg %p151
        $region50: #{tpu_custom_call.1} parent=39 // pred_check_branch
          %383 = sbr.rel (%p381) target = $region52
        $region51: #{tpu_custom_call.1} parent=39 // pred_region
          %s385 = ssub.s32 128, 128
          %386 = vsyncadd %s377, %s385
          %s387 = smul.addr %s23, 128
          %s388 = scalar_lea.hbm %s5, %s387
          %s390 = sshll.u32 %s380, 4
          %s391 = int_to_ptr.vmem [resolvable:$true] %s390
          %393 = dma.vmem_to_hbm [thread:$0]  %s391, 128, %s388, %s377
        $region52: #{tpu_custom_call.1} parent=39 // pred_fallthru
          _
      $region40: #{tpu_custom_call.1} parent=5 // pred_fallthru
        _
      %p394 = scmp.le.s32.totalorder 2, %s18
      // Predicated region
      $region53: #{tpu_custom_call.1} parent=5 // pred_check
        %p395 = pneg %p394
      $region54: #{tpu_custom_call.1} parent=5 // pred_check_branch
        %397 = sbr.rel (%p395) target = $region56
      $region55: #{tpu_custom_call.1} parent=5 // pred_region
        %s398 = ssub.s32 %s18, 2
        // Predicated region
        $region57: #{tpu_custom_call.1} parent=55 // pred_check
          %p399 = pneg %p157
        $region58: #{tpu_custom_call.1} parent=55 // pred_check_branch
          %401 = sbr.rel (%p399) target = $region60
        $region59: #{tpu_custom_call.1} parent=55 // pred_region
          %s402 = sand.u32 %s142, 1
          %s403 = scalar_lea.sflag [#allocation4], %s402
          %s404 = sand.u32 %s142, 1
          %s405 = smul.addr %s404, 8
          %s406 = scalar_lea.vmem [#allocation7], %s405
          %407 = dma.done %s403, 128
        $region60: #{tpu_custom_call.1} parent=55 // pred_fallthru
          _
      $region56: #{tpu_custom_call.1} parent=5 // pred_fallthru
        _
    $region6: #{tpu_custom_call.1} parent=1 // loop_footer
      %s22 = sadd.s32 1, %s18
    $region7: #{tpu_custom_call.1} parent=1 // loop_footer_branch
      %17 = sbr.rel target = $region3
    $region8: #{tpu_custom_call.1} parent=1 // loop_exit
      _
    %408 = vsyncpa [#allocation3], 1
    %s409 = scalar_lea.sflag [#allocation3], 1
    %410 = vsyncpa %s409, 1
    %411 = vsyncpa [#allocation6], 1
    %412 = vsyncpa [#allocation4], 1
    %s413 = scalar_lea.sflag [#allocation4], 1
    %414 = vsyncpa %s413, 1

// kernel: tpu_custom_call.1
$region0: #{tpu_custom_call.1}
  #allocation0 [shape = 'u32[]', space=smem, size = 0x4, offset = 0x4, fixed_abs, tag = 'smem constant byte address 0x4 - core index']
  #allocation1 [shape = 'u32[144,128]{1,0:T(1,128)}', space=vmem, size = 0x12000, scoped, tag = 'internal scratch']
  %s0 = inlined_call_operand.hbm [shape: f32[16,32], index: 0, kind: input, shape index: {}]
  %s1 = inlined_call_operand.hbm [shape: f32[32,32], index: 1, kind: input, shape index: {}]
  %s2 = inlined_call_operand.vmem [shape: f32[1,32], index: 2, kind: input, shape index: {}]
  %s3 = inlined_call_operand.vmem [shape: f32[1,32], index: 3, kind: input, shape index: {}]
  %s4 = inlined_call_operand.vmem [shape: f32[1,32], index: 4, kind: input, shape index: {}]
  %s5 = inlined_call_operand.hbm [shape: f32[16,32], index: 5, kind: output, shape index: {}]
  %s6 = sld [smem:[#allocation0]]
  $region61: #{tpu_custom_call.1} parent=0
    _
  %s8 = ssub.s32 1, %s6
  %s9 = scalar_select 0, %s8, %s6
  $region1: #{tpu_custom_call.1} parent=0
    #allocation2 [shape = 'u8[8192]{0}', space=vmem, size = 0x2000, scoped, tag = 'input window, operand 0']
    #allocation3 [shape = 's32[2]{0}', space=sflag, size = 0x8, scoped, tag = 'scoped memory for tpu_custom_call.1']
    #allocation4 [shape = 's32[2]{0}', space=sflag, size = 0x8, scoped, tag = 'scoped memory for tpu_custom_call.1']
    #allocation5 [shape = 'u8[16384]{0}', space=vmem, size = 0x4000, scoped, tag = 'input window, operand 1, single buffered']
    #allocation6 [shape = 's32[1]{0}', space=sflag, size = 0x4, scoped, tag = 'scoped memory for tpu_custom_call.1']
    #allocation7 [shape = 'u8[8192]{0}', space=vmem, size = 0x2000, scoped, tag = 'output window, operand 0']
    %10 = vsyncpa [#allocation3], 0
    %s11 = scalar_lea.sflag [#allocation3], 1
    %12 = vsyncpa %s11, 0
    %13 = vsyncpa [#allocation6], 0
    %14 = vsyncpa [#allocation4], 0
    %s15 = scalar_lea.sflag [#allocation4], 1
    %16 = vsyncpa %s15, 0
    loop: start=0, step=1, limit=4
    $region2: #{tpu_custom_call.1} parent=1 // loop_pre_header
      _
    $region3: #{tpu_custom_call.1} parent=1 // loop_header
      %s18 = sphi 0, %s22
      %p19 = scmp.ge.s32.totalorder %s18, 4
      %s28 = sphi 0, %s30
      %s31 = sphi 0, %s28
      %s32 = sphi 0, %s31
      %s48 = sphi 0, %s32
      %s52 = sphi 0, %s52
      %s54 = sphi 0, %s52
      %s55 = sphi 0, %s54
      %s69 = sphi 0, %s55
      %s73 = sphi 0, %s73
      %s75 = sphi 0, %s73
      %s76 = sphi 0, %s75
      %s90 = sphi 0, %s76
      %s94 = sphi 0, %s94
      %s96 = sphi 0, %s94
      %s97 = sphi 0, %s96
      %s111 = sphi 0, %s97
      %s115 = sphi 0, %s115
      %s117 = sphi 0, %s115
      %s118 = sphi 0, %s117
      %s132 = sphi 0, %s118
      %s138 = sphi 0, %s140
      %s141 = sphi 0, %s138
      %s142 = sphi 0, %s141
      %s158 = sphi 0, %s142
    $region4: #{tpu_custom_call.1} parent=1 // loop_header_branch
      %21 = sbr.rel (%p19) target = $region8
    $region5: #{tpu_custom_call.1} parent=1 // loop_body
      %s23 = ssub.s32 %s18, 1
      %s24 = ssub.s32 %s18, 2
      %s25 = sadd.s32 %s18, 1
      %s26 = ssub.s32 %s18, %s25
      %p27 = scmp.eq.s32.totalorder %s26, 0
      %s29 = sadd.s32 %s28, 1
      %s30 = scalar_select %p27, %s28, %s29
      %p33 = pneg %p27
      %p34 = scmp.eq.s32.totalorder %s18, 1
      %p35 = por %p33, %p34
      %p36 = scmp.ne.s32.totalorder %s28, %s31
      %p37 = scmp.eq.s32.totalorder %s18, 0
      %p38 = por %p36, %p37
      %p39 = scmp.ne.s32.totalorder %s28, %s31
      %p40 = scmp.eq.s32.totalorder %s23, 1
      %p41 = por %p39, %p40
      %p42 = scmp.ne.s32.totalorder %s31, %s32
      %p43 = scmp.eq.s32.totalorder %s23, 0
      %p44 = por %p42, %p43
      %p45 = scmp.ne.s32.totalorder %s31, %s32
      %p46 = scmp.eq.s32.totalorder %s24, 1
      %p47 = por %p45, %p46
      %p49 = scmp.ne.s32.totalorder %s32, %s48
      %p50 = scmp.eq.s32.totalorder %s24, 0
      %p51 = por %p49, %p50
      %s53 = sadd.s32 %s52, 1
      %p56 = scmp.eq.s32.totalorder %s18, 1
      %p57 = scmp.ne.s32.totalorder %s52, %s54
      %p58 = scmp.eq.s32.totalorder %s18, 0
      %p59 = por %p57, %p58
      %p60 = scmp.ne.s32.totalorder %s52, %s54
      %p61 = scmp.eq.s32.totalorder %s23, 1
      %p62 = por %p60, %p61
      %p63 = scmp.ne.s32.totalorder %s54, %s55
      %p64 = scmp.eq.s32.totalorder %s23, 0
      %p65 = por %p63, %p64
      %p66 = scmp.ne.s32.totalorder %s54, %s55
      %p67 = scmp.eq.s32.totalorder %s24, 1
      %p68 = por %p66, %p67
      %p70 = scmp.ne.s32.totalorder %s55, %s69
      %p71 = scmp.eq.s32.totalorder %s24, 0
      %p72 = por %p70, %p71
      %s74 = sadd.s32 %s73, 1
      %p77 = scmp.eq.s32.totalorder %s18, 1
      %p78 = scmp.ne.s32.totalorder %s73, %s75
      %p79 = scmp.eq.s32.totalorder %s18, 0
      %p80 = por %p78, %p79
      %p81 = scmp.ne.s32.totalorder %s73, %s75
      %p82 = scmp.eq.s32.totalorder %s23, 1
      %p83 = por %p81, %p82
      %p84 = scmp.ne.s32.totalorder %s75, %s76
      %p85 = scmp.eq.s32.totalorder %s23, 0
      %p86 = por %p84, %p85
      %p87 = scmp.ne.s32.totalorder %s75, %s76
      %p88 = scmp.eq.s32.totalorder %s24, 1
      %p89 = por %p87, %p88
      %p91 = scmp.ne.s32.totalorder %s76, %s90
      %p92 = scmp.eq.s32.totalorder %s24, 0
      %p93 = por %p91, %p92
      %s95 = sadd.s32 %s94, 1
      %p98 = scmp.eq.s32.totalorder %s18, 1
      %p99 = scmp.ne.s32.totalorder %s94, %s96
      %p100 = scmp.eq.s32.totalorder %s18, 0
      %p101 = por %p99, %p100
      %p102 = scmp.ne.s32.totalorder %s94, %s96
      %p103 = scmp.eq.s32.totalorder %s23, 1
      %p104 = por %p102, %p103
      %p105 = scmp.ne.s32.totalorder %s96, %s97
      %p106 = scmp.eq.s32.totalorder %s23, 0
      %p107 = por %p105, %p106
      %p108 = scmp.ne.s32.totalorder %s96, %s97
      %p109 = scmp.eq.s32.totalorder %s24, 1
      %p110 = por %p108, %p109
      %p112 = scmp.ne.s32.totalorder %s97, %s111
      %p113 = scmp.eq.s32.totalorder %s24, 0
      %p114 = por %p112, %p113
      %s116 = sadd.s32 %s115, 1
      %p119 = scmp.eq.s32.totalorder %s18, 1
      %p120 = scmp.ne.s32.totalorder %s115, %s117
      %p121 = scmp.eq.s32.totalorder %s18, 0
      %p122 = por %p120, %p121
      %p123 = scmp.ne.s32.totalorder %s115, %s117
      %p124 = scmp.eq.s32.totalorder %s23, 1
      %p125 = por %p123, %p124
      %p126 = scmp.ne.s32.totalorder %s117, %s118
      %p127 = scmp.eq.s32.totalorder %s23, 0
      %p128 = por %p126, %p127
      %p129 = scmp.ne.s32.totalorder %s117, %s118
      %p130 = scmp.eq.s32.totalorder %s24, 1
      %p131 = por %p129, %p130
      %p133 = scmp.ne.s32.totalorder %s118, %s132
      %p134 = scmp.eq.s32.totalorder %s24, 0
      %p135 = por %p133, %p134
      %s136 = ssub.s32 %s18, %s25
      %p137 = scmp.eq.s32.totalorder %s136, 0
      %s139 = sadd.s32 %s138, 1
      %s140 = scalar_select %p137, %s138, %s139
      %p143 = pneg %p137
      %p144 = scmp.eq.s32.totalorder %s18, 1
      %p145 = por %p143, %p144
      %p146 = scmp.ne.s32.totalorder %s138, %s141
      %p147 = scmp.eq.s32.totalorder %s18, 0
      %p148 = por %p146, %p147
      %p149 = scmp.ne.s32.totalorder %s138, %s141
      %p150 = scmp.eq.s32.totalorder %s23, 1
      %p151 = por %p149, %p150
      %p152 = scmp.ne.s32.totalorder %s141, %s142
      %p153 = scmp.eq.s32.totalorder %s23, 0
      %p154 = por %p152, %p153
      %p155 = scmp.ne.s32.totalorder %s141, %s142
      %p156 = scmp.eq.s32.totalorder %s24, 1
      %p157 = por %p155, %p156
      %p159 = scmp.ne.s32.totalorder %s142, %s158
      %p160 = scmp.eq.s32.totalorder %s24, 0
      %p161 = por %p159, %p160
      %p162 = scmp.le.s32.totalorder 1, %s18
      %p163 = scmp.lt.s32.totalorder %s18, 3
      %p164 = pnand %p162, %p163
      %p165 = pneg %p164
      // Predicated region
      $region9: #{tpu_custom_call.1} parent=5 // pred_check
        _
      $region10: #{tpu_custom_call.1} parent=5 // pred_check_branch
        %167 = sbr.rel (%p164) target = $region12
      $region11: #{tpu_custom_call.1} parent=5 // pred_region
        %s168 = ssub.s32 %s18, 1
        // Predicated region
        $region13: #{tpu_custom_call.1} parent=11 // pred_check
          %p169 = pneg %p65
        $region14: #{tpu_custom_call.1} parent=11 // pred_check_branch
          %171 = sbr.rel (%p169) target = $region16
        $region15: #{tpu_custom_call.1} parent=11 // pred_region
          %s173 = ssub.s32 512, 512
          %174 = vsyncadd [#allocation6], %s173
          %s175 = sshll.u32 [#allocation5], 4
          %s176 = int_to_ptr.vmem [resolvable:$true] %s175
          %181 = dma.hbm_to_vmem [thread:$0]  %s1, 512, %s176, [#allocation6], 128, 128, 8
        $region16: #{tpu_custom_call.1} parent=11 // pred_fallthru
          _
        // Predicated region
        $region17: #{tpu_custom_call.1} parent=11 // pred_check
          %p182 = pneg %p86
        $region18: #{tpu_custom_call.1} parent=11 // pred_check_branch
          %184 = sbr.rel (%p182) target = $region20
        $region19: #{tpu_custom_call.1} parent=11 // pred_region
          _
        $region20: #{tpu_custom_call.1} parent=11 // pred_fallthru
          _
        // Predicated region
        $region21: #{tpu_custom_call.1} parent=11 // pred_check
          %p185 = pneg %p107
        $region22: #{tpu_custom_call.1} parent=11 // pred_check_branch
          %187 = sbr.rel (%p185) target = $region24
        $region23: #{tpu_custom_call.1} parent=11 // pred_region
          _
        $region24: #{tpu_custom_call.1} parent=11 // pred_fallthru
          _
        // Predicated region
        $region25: #{tpu_custom_call.1} parent=11 // pred_check
          %p188 = pneg %p128
        $region26: #{tpu_custom_call.1} parent=11 // pred_check_branch
          %190 = sbr.rel (%p188) target = $region28
        $region27: #{tpu_custom_call.1} parent=11 // pred_region
          _
        $region28: #{tpu_custom_call.1} parent=11 // pred_fallthru
          _
      $region12: #{tpu_custom_call.1} parent=5 // pred_fallthru
        _
      %p191 = scmp.lt.s32.totalorder %s18, 2
      // Predicated region
      $region29: #{tpu_custom_call.1} parent=5 // pred_check
        %p192 = pneg %p191
      $region30: #{tpu_custom_call.1} parent=5 // pred_check_branch
        %194 = sbr.rel (%p192) target = $region32
      $region31: #{tpu_custom_call.1} parent=5 // pred_region
        // Predicated region
        $region33: #{tpu_custom_call.1} parent=31 // pred_check
          %p195 = pneg %p38
        $region34: #{tpu_custom_call.1} parent=31 // pred_check_branch
          %197 = sbr.rel (%p195) target = $region36
        $region35: #{tpu_custom_call.1} parent=31 // pred_region
          %s198 = sand.u32 %s28, 1
          %s199 = scalar_lea.sflag [#allocation3], %s198
          %s200 = sand.u32 %s28, 1
          %s201 = smul.addr %s200, 8
          %s202 = scalar_lea.vmem [#allocation2], %s201
          %s204 = ssub.s32 128, 128
          %205 = vsyncadd %s199, %s204
          %s206 = smul.addr %s18, 128
          %s207 = scalar_lea.hbm %s0, %s206
          %s209 = sshll.u32 %s202, 4
          %s210 = int_to_ptr.vmem [resolvable:$true] %s209
          %212 = dma.hbm_to_vmem [thread:$0]  %s207, 128, %s210, %s199
        $region36: #{tpu_custom_call.1} parent=31 // pred_fallthru
          _
      $region32: #{tpu_custom_call.1} parent=5 // pred_fallthru
        _
      %p213 = scmp.le.s32.totalorder 1, %s18
      %p214 = scmp.lt.s32.totalorder %s18, 3
      %p215 = pnand %p213, %p214
      %p216 = pneg %p215
      // Predicated region
      $region37: #{tpu_custom_call.1} parent=5 // pred_check
        _
      $region38: #{tpu_custom_call.1} parent=5 // pred_check_branch
        %218 = sbr.rel (%p215) target = $region40
      $region39: #{tpu_custom_call.1} parent=5 // pred_region
        %s219 = ssub.s32 %s18, 1
        %s220 = sand.u32 %s31, 1
        %s221 = scalar_lea.sflag [#allocation3], %s220
        %s222 = sand.u32 %s31, 1
        %s223 = smul.addr %s222, 8
        %s224 = scalar_lea.vmem [#allocation2], %s223
        // Predicated region
        $region41: #{tpu_custom_call.1} parent=39 // pred_check
          %p225 = pneg %p44
        $region42: #{tpu_custom_call.1} parent=39 // pred_check_branch
          %227 = sbr.rel (%p225) target = $region44
        $region43: #{tpu_custom_call.1} parent=39 // pred_region
          %228 = dma.done %s221, 128
        $region44: #{tpu_custom_call.1} parent=39 // pred_fallthru
          _
        // Predicated region
        $region45: #{tpu_custom_call.1} parent=39 // pred_check
          %p229 = pneg %p65
        $region46: #{tpu_custom_call.1} parent=39 // pred_check_branch
          %231 = sbr.rel (%p229) target = $region48
        $region47: #{tpu_custom_call.1} parent=39 // pred_region
          %232 = dma.done [#allocation6], 512
        $region48: #{tpu_custom_call.1} parent=39 // pred_fallthru
          _
        %s233 = sand.u32 %s31, 1
        %s234 = scalar_lea.sflag [#allocation3], %s233
        %s235 = sand.u32 %s31, 1
        %s236 = smul.addr %s235, 8
        %s237 = scalar_lea.vmem [#allocation2], %s236
        %p238 = pneg %p44
        %p239 = pneg %p41
        %p240 = pneg %p65
        %p241 = pneg %p62
        %p242 = pneg %p86
        %p243 = pneg %p83
        %p244 = pneg %p107
        %p245 = pneg %p104
        %p246 = pneg %p128
        %p247 = pneg %p125
        %p248 = pneg %p154
        %p249 = pneg %p151
        %s250 = sand.u32 %s141, 1
        %s251 = scalar_lea.sflag [#allocation4], %s250
        %s252 = sand.u32 %s141, 1
        %s253 = smul.addr %s252, 8
        %s254 = scalar_lea.vmem [#allocation7], %s253
        %v255 = vld [vmem:[%s224] sm:$0xff]
        %v256 = vld [vmem:[#allocation5] sm:$0xff]
        %v257 = vld [vmem:[#allocation5 + $0x8] sm:$0xff]
        %v258 = vld [vmem:[#allocation5 + $0x10] sm:$0xff]
        %v259 = vld [vmem:[#allocation5 + $0x18] sm:$0xff]
        %v260 = vld [vmem:[%s2] sm:$0x1]
        %v262 = vlaneseq
        %v263 = vshrl.u32 %v262, 7
        %v264 = vsub.s32 0, %v263
        %v265 = vrot.slane %v260, %v264
        %vm267 = vcmask 261120
        %v269 = vsel %vm267, %v255, 0
        %271 = vmatprep.subr.mxu0 0.0
        %272 = vmatpush1.msra.mxu0 %v256
        %273 = vmatprep.subr.mxu0 0.0
        %274 = vmatpush1.msra.mxu0 %v257
        %275 = vmatprep.subr.mxu0 0.0
        %276 = vmatpush1.msra.mxu0 %v258
        %277 = vmatprep.subr.mxu0 0.0
        %278 = vmatpush1.msra.mxu0 %v259
        %279 = vmatprep.subr.mxu0 0.0
        %280 = vmatpush1.msra.mxu0 0.0
        %281 = vmatprep.subr.mxu0 0.0
        %282 = vmatpush1.msra.mxu0 0.0
        %283 = vmatprep.subr.mxu0 0.0
        %284 = vmatpush1.msra.mxu0 0.0
        %285 = vmatprep.subr.mxu0 0.0
        %286 = vmatpush1.msra.mxu0 0.0
        %287 = vmatprep.subr.mxu0 0.0
        %288 = vmatpush1.msra.mxu0 0.0
        %289 = vmatprep.subr.mxu0 0.0
        %290 = vmatpush1.msra.mxu0 0.0
        %291 = vmatprep.subr.mxu0 0.0
        %292 = vmatpush1.msra.mxu0 0.0
        %293 = vmatprep.subr.mxu0 0.0
        %294 = vmatpush1.msra.mxu0 0.0
        %295 = vmatprep.subr.mxu0 0.0
        %296 = vmatpush1.msra.mxu0 0.0
        %297 = vmatprep.subr.mxu0 0.0
        %298 = vmatpush1.msra.mxu0 0.0
        %299 = vmatprep.subr.mxu0 0.0
        %300 = vmatpush1.msra.mxu0 0.0
        %301 = vmatprep.subr.mxu0 0.0
        %302 = vmatpush1.msra.mxu0 0.0
        %303 = vmatprep.subr.mxu0 0.0
        %304 = vmatpush1.msra.mxu0 0.0
        %305 = vmatprep.subr.mxu0 0.0
        %306 = vmatpush1.msra.mxu0 0.0
        %307 = vmatprep.subr.mxu0 0.0
        %308 = vmatpush1.msra.mxu0 0.0
        %309 = vmatprep.subr.mxu0 0.0
        %310 = vmatpush1.msra.mxu0 0.0
        %311 = vmatprep.subr.mxu0 0.0
        %312 = vmatpush1.msra.mxu0 0.0
        %313 = vmatprep.subr.mxu0 0.0
        %314 = vmatpush1.msra.mxu0 0.0
        %315 = vmatprep.subr.mxu0 0.0
        %316 = vmatpush1.msra.mxu0 0.0
        %317 = vmatprep.subr.mxu0 0.0
        %318 = vmatpush1.msra.mxu0 0.0
        %319 = vmatprep.subr.mxu0 0.0
        %320 = vmatpush1.msra.mxu0 0.0
        %321 = vmatprep.subr.mxu0 0.0
        %322 = vmatpush1.msra.mxu0 0.0
        %323 = vmatprep.subr.mxu0 0.0
        %324 = vmatpush1.msra.mxu0 0.0
        %325 = vmatprep.subr.mxu0 0.0
        %326 = vmatpush1.msra.mxu0 0.0
        %327 = vmatprep.subr.mxu0 0.0
        %328 = vmatpush1.msra.mxu0 0.0
        %329 = vmatprep.subr.mxu0 0.0
        %330 = vmatpush1.msra.mxu0 0.0
        %331 = vmatprep.subr.mxu0 0.0
        %332 = vmatpush1.msra.mxu0 0.0
        %333 = vmatprep.subr.mxu0 0.0
        %334 = vmatpush1.msra.mxu0 0.0
        %335 = vmatprep.mubr.f32.mxu0 0.0
        %336 = vmatmul.mubr.f32.gmra.mrb[0].mxu0 %v269
        %v337 = vpop.f32.mrb[0].mxu0
        %v338 = vadd.f32 %v265, %v337
        %v339 = vpop.f32.mrb[0].mxu0
        %340 = vdwg.mxu0
        %v341 = vld [vmem:[%s3] sm:$0x1]
        %v342 = vld [vmem:[%s4] sm:$0x1]
        %v343 = vmul.f32 %v338, 0.5
        %v344 = vmul.f32 %v338, 0.70710677
        %v345 = verf.f32.pop %v344
        %v346 = vadd.f32 %v345, 1.0
        %v347 = vmul.f32 %v343, %v346
        %v348 = vsel %vm267, %v347, 0.0
        %349 = vadd.xlane.f32.xlu0 %v348
        %v350 = vpop.xlane.xlu0 %349
        %v351 = vmul.f32 %v350, 0.03125
        %v352 = vsub.f32 %v347, %v351
        %v353 = vmul.f32 %v352, %v352
        %v354 = vsel %vm267, %v353, 0.0
        %355 = vadd.xlane.f32.xlu0 %v354
        %v356 = vpop.xlane.xlu0 %355
        %v357 = vmul.f32 %v356, 0.03125
        %v358 = vadd.f32 %v357, 1e-12
        %v359 = vrsqrt.pop %v358
        %v360 = vmul.f32 %v352, %v359
        %v362 = vlaneseq
        %v363 = vshrl.u32 %v362, 7
        %v364 = vsub.s32 0, %v363
        %v365 = vrot.slane %v341, %v364
        %v367 = vmul.f32 %v360, %v365
        %v369 = vlaneseq
        %v370 = vshrl.u32 %v369, 7
        %v371 = vsub.s32 0, %v370
        %v372 = vrot.slane %v342, %v371
        %v374 = vadd.f32 %v367, %v372
        %375 = vst.msk [vmem:[%s254] sm:$0xff] %vm267, %v374
        %s376 = sand.u32 %s141, 1
        %s377 = scalar_lea.sflag [#allocation4], %s376
        %s378 = sand.u32 %s141, 1
        %s379 = smul.addr %s378, 8
        %s380 = scalar_lea.vmem [#allocation7], %s379
        // Predicated region
        $region49: #{tpu_custom_call.1} parent=39 // pred_check
          %p381 = pneg %p151
        $region50: #{tpu_custom_call.1} parent=39 // pred_check_branch
          %383 = sbr.rel (%p381) target = $region52
        $region51: #{tpu_custom_call.1} parent=39 // pred_region
          %s385 = ssub.s32 128, 128
          %386 = vsyncadd %s377, %s385
          %s387 = smul.addr %s23, 128
          %s388 = scalar_lea.hbm %s5, %s387
          %s390 = sshll.u32 %s380, 4
          %s391 = int_to_ptr.vmem [resolvable:$true] %s390
          %393 = dma.vmem_to_hbm [thread:$0]  %s391, 128, %s388, %s377
        $region52: #{tpu_custom_call.1} parent=39 // pred_fallthru
          _
      $region40: #{tpu_custom_call.1} parent=5 // pred_fallthru
        _
      %p394 = scmp.le.s32.totalorder 2, %s18
      // Predicated region
      $region53: #{tpu_custom_call.1} parent=5 // pred_check
        %p395 = pneg %p394
      $region54: #{tpu_custom_call.1} parent=5 // pred_check_branch
        %397 = sbr.rel (%p395) target = $region56
      $region55: #{tpu_custom_call.1} parent=5 // pred_region
        %s398 = ssub.s32 %s18, 2
        // Predicated region
        $region57: #{tpu_custom_call.1} parent=55 // pred_check
          %p399 = pneg %p157
        $region58: #{tpu_custom_call.1} parent=55 // pred_check_branch
          %401 = sbr.rel (%p399) target = $region60
        $region59: #{tpu_custom_call.1} parent=55 // pred_region
          %s402 = sand.u32 %s142, 1
          %s403 = scalar_lea.sflag [#allocation4], %s402
          %s404 = sand.u32 %s142, 1
          %s405 = smul.addr %s404, 8
          %s406 = scalar_lea.vmem [#allocation7], %s405
          %407 = dma.done %s403, 128
        $region60: #{tpu_custom_call.1} parent=55 // pred_fallthru
          _
      $region56: #{tpu_custom_call.1} parent=5 // pred_fallthru
        _
    $region6: #{tpu_custom_call.1} parent=1 // loop_footer
      %s22 = sadd.s32 1, %s18
    $region7: #{tpu_custom_call.1} parent=1 // loop_footer_branch
      %17 = sbr.rel target = $region3
    $region8: #{tpu_custom_call.1} parent=1 // loop_exit
      _
    %408 = vsyncpa [#allocation3], 1
    %s409 = scalar_lea.sflag [#allocation3], 1
    %410 = vsyncpa %s409, 1
    %411 = vsyncpa [#allocation6], 1
    %412 = vsyncpa [#allocation4], 1
    %s413 = scalar_lea.sflag [#allocation4], 1
    %414 = vsyncpa %s413, 1

</llo_original>
